<compile_context>
chip_gen: v6e
topology: v6e:2x2x1
jax: 0.10.0
libtpu: 0.0.40
codegen_flags: <defaults>
</compile_context>

<pallas_src>
import functools

import jax
import jax.numpy as jnp
from jax.experimental import pallas as pl
from jax.experimental.pallas import tpu as pltpu

EPS = 1e-5
LANE = 128


def _round_up(x, m):
    return (x + m - 1) // m * m


# --------------------------------------------------------------------------- kernels

def _linear_stats_kernel(x_ref, w_ref, b_ref, z_ref, stats_ref, *, n_valid, tile_n):
    """z = x @ w + b   (bf16 MXU, f32 accum) + per-tile feature-wise sum / sum-of-squares."""
    z = jnp.dot(x_ref[...], w_ref[...], preferred_element_type=jnp.float32) + b_ref[...]
    z_ref[...] = z
    if n_valid % tile_n != 0:  # mask padded rows out of the BN statistics (static check)
        row = pl.program_id(0) * tile_n + jax.lax.broadcasted_iota(jnp.int32, (tile_n, 1), 0)
        z = jnp.where(row < n_valid, z, 0.0)
    s = jnp.sum(z, axis=0, keepdims=True)
    ss = jnp.sum(z * z, axis=0, keepdims=True)
    stats_ref[...] = jnp.concatenate([s, ss], axis=0).reshape(stats_ref.shape)


def _bn_relu_linear_stats_kernel(z1_ref, sc_ref, sh_ref, w_ref, b_ref,
                                 z2_ref, stats_ref, *, n_valid, tile_n):
    """h = relu(z1*scale + shift);  z2 = h @ w + b;  per-tile BN stats of z2."""
    h = jnp.maximum(z1_ref[...] * sc_ref[...] + sh_ref[...], 0.0)
    z2 = jnp.dot(h.astype(jnp.bfloat16), w_ref[...],
                 preferred_element_type=jnp.float32) + b_ref[...]
    z2_ref[...] = z2
    if n_valid % tile_n != 0:
        row = pl.program_id(0) * tile_n + jax.lax.broadcasted_iota(jnp.int32, (tile_n, 1), 0)
        z2 = jnp.where(row < n_valid, z2, 0.0)
    s = jnp.sum(z2, axis=0, keepdims=True)
    ss = jnp.sum(z2 * z2, axis=0, keepdims=True)
    stats_ref[...] = jnp.concatenate([s, ss], axis=0).reshape(stats_ref.shape)


def _bn_relu_kernel(z_ref, sc_ref, sh_ref, o_ref):
    """out = relu(z*scale + shift)."""
    o_ref[...] = jnp.maximum(z_ref[...] * sc_ref[...] + sh_ref[...], 0.0).astype(o_ref.dtype)


# --------------------------------------------------------------------------- wrapper

def _scale_shift(stats, gamma, beta, n_valid):
    """Fold partial (sum, sumsq) tiles into BatchNorm scale/shift, shape (1, D)."""
    s = jnp.sum(stats[:, 0, :], axis=0, keepdims=True)
    ss = jnp.sum(stats[:, 1, :], axis=0, keepdims=True)
    mean = s / n_valid
    var = jnp.maximum(ss / n_valid - mean * mean, 0.0)   # biased variance (torch training mode)
    scale = gamma * jax.lax.rsqrt(var + EPS)
    shift = beta - mean * scale
    return scale, shift


def apply_node_func(h, params, *, tile_n=128):
    """h: [N, in_dim] float32 node features.  Returns [N, out_dim] float32."""
    n, in_dim = h.shape
    hid = params["w1"].shape[1]
    out_dim = params["w2"].shape[1]

    din_p = _round_up(in_dim, LANE)
    dh_p = _round_up(hid, LANE)
    do_p = _round_up(out_dim, LANE)
    n_p = _round_up(n, tile_n)
    num_tiles = n_p // tile_n

    pad2 = lambda a, r, c: jnp.pad(a, ((0, r - a.shape[0]), (0, c - a.shape[1])))

    # Lane-dense (128-multiple) padding; bf16 for MXU operands / HBM traffic of h & weights.
    h_p = pad2(h, n_p, din_p).astype(jnp.bfloat16)
    w1 = pad2(params["w1"], din_p, dh_p).astype(jnp.bfloat16)
    w2 = pad2(params["w2"], dh_p, do_p).astype(jnp.bfloat16)
    b1 = pad2(params["b1"], 1, dh_p)
    b2 = pad2(params["b2"], 1, do_p)
    g1 = pad2(params["g1"], 1, dh_p)        # padded gamma = 0  -> padded lanes stay 0
    g2 = pad2(params["g2"], 1, do_p)
    beta1 = pad2(params["beta1"], 1, dh_p)
    beta2 = pad2(params["beta2"], 1, do_p)

    row_spec = lambda d: pl.BlockSpec((tile_n, d), lambda i: (i, 0))
    full_spec = lambda r, c: pl.BlockSpec((r, c), lambda i: (0, 0))
    stats_spec = lambda d: pl.BlockSpec((1, 2, d), lambda i: (i, 0, 0))
    parallel = pltpu.CompilerParams(dimension_semantics=("parallel",))

    # ---- pass 1: z1 = h @ w1 + b1  (+ per-tile BN stats of z1) ----
    z1, st1 = pl.pallas_call(
        functools.partial(_linear_stats_kernel, n_valid=n, tile_n=tile_n),
        grid=(num_tiles,),
        in_specs=[row_spec(din_p), full_spec(din_p, dh_p), full_spec(1, dh_p)],
        out_specs=(row_spec(dh_p), stats_spec(dh_p)),
        out_shape=(jax.ShapeDtypeStruct((n_p, dh_p), jnp.float32),
                   jax.ShapeDtypeStruct((num_tiles, 2, dh_p), jnp.float32)),
        compiler_params=parallel,
        cost_estimate=pl.CostEstimate(
            flops=2 * n_p * din_p * dh_p + 3 * n_p * dh_p,
            transcendentals=0,
            bytes_accessed=(n_p * din_p * 2 + din_p * dh_p * 2
                            + n_p * dh_p * 4 + num_tiles * 2 * dh_p * 4)),
    )(h_p, w1, b1)
    scale1, shift1 = _scale_shift(st1, g1, beta1, n)

    # ---- pass 2: h1 = relu(bn(z1));  z2 = h1 @ w2 + b2  (+ per-tile BN stats of z2) ----
    z2, st2 = pl.pallas_call(
        functools.partial(_bn_relu_linear_stats_kernel, n_valid=n, tile_n=tile_n),
        grid=(num_tiles,),
        in_specs=[row_spec(dh_p), full_spec(1, dh_p), full_spec(1, dh_p),
                  full_spec(dh_p, do_p), full_spec(1, do_p)],
        out_specs=(row_spec(do_p), stats_spec(do_p)),
        out_shape=(jax.ShapeDtypeStruct((n_p, do_p), jnp.float32),
                   jax.ShapeDtypeStruct((num_tiles, 2, do_p), jnp.float32)),
        compiler_params=parallel,
        cost_estimate=pl.CostEstimate(
            flops=2 * n_p * dh_p * do_p + 3 * n_p * dh_p + 3 * n_p * do_p,
            transcendentals=0,
            bytes_accessed=(n_p * dh_p * 4 + dh_p * do_p * 2
                            + n_p * do_p * 4 + num_tiles * 2 * do_p * 4)),
    )(z1, scale1, shift1, w2, b2)
    scale2, shift2 = _scale_shift(st2, g2, beta2, n)

    # ---- pass 3: out = relu(bn(z2)) ----
    out_padded = pl.pallas_call(
        _bn_relu_kernel,
        grid=(num_tiles,),
        in_specs=[row_spec(do_p), full_spec(1, do_p), full_spec(1, do_p)],
        out_specs=row_spec(do_p),
        out_shape=jax.ShapeDtypeStruct((n_p, do_p), jnp.float32),
        compiler_params=parallel,
        cost_estimate=pl.CostEstimate(
            flops=3 * n_p * do_p,
            transcendentals=0,
            bytes_accessed=2 * n_p * do_p * 4),
    )(z2, scale2, shift2)

    return out_padded[:n, :out_dim]


# --------------------------------------------------------------------------- test

def init_params(key, in_dim, hidden_dim, out_dim):
    ks = jax.random.split(key, 4)
    s1 = 1.0 / jnp.sqrt(in_dim)
    s2 = 1.0 / jnp.sqrt(hidden_dim)
    return {
        # Linear 1 (in_dim -> hidden_dim); weights stored as [D_in, D_out] (= W_torch.T)
        "w1": jax.random.uniform(ks[0], (in_dim, hidden_dim), jnp.float32, -s1, s1),
        "b1": jax.random.uniform(ks[1], (1, hidden_dim), jnp.float32, -s1, s1),
        "g1": jnp.ones((1, hidden_dim), jnp.float32),
        "beta1": jnp.zeros((1, hidden_dim), jnp.float32),
        # Linear 2 (hidden_dim -> out_dim)
        "w2": jax.random.uniform(ks[2], (hidden_dim, out_dim), jnp.float32, -s2, s2),
        "b2": jax.random.uniform(ks[3], (1, out_dim), jnp.float32, -s2, s2),
        # ApplyNodeFunc's BatchNorm1d(out_dim)
        "g2": jnp.ones((1, out_dim), jnp.float32),
        "beta2": jnp.zeros((1, out_dim), jnp.float32),
    }


def reference(h, p):
    """Pure-JAX reference mirroring the kernel's mixed precision (bf16 MXU operands,
    f32 BatchNorm math).  Differs from a full-f32 torch forward only by bf16 matmul
    rounding, which is a deliberate performance choice."""
    bf = jnp.bfloat16
    z1 = jnp.dot(h.astype(bf), p["w1"].astype(bf), preferred_element_type=jnp.float32) + p["b1"]
    m1 = z1.mean(0, keepdims=True)
    v1 = ((z1 - m1) ** 2).mean(0, keepdims=True)
    h1 = jnp.maximum((z1 - m1) / jnp.sqrt(v1 + EPS) * p["g1"] + p["beta1"], 0.0)
    z2 = jnp.dot(h1.astype(bf), p["w2"].astype(bf), preferred_element_type=jnp.float32) + p["b2"]
    m2 = z2.mean(0, keepdims=True)
    v2 = ((z2 - m2) ** 2).mean(0, keepdims=True)
    return jnp.maximum((z2 - m2) / jnp.sqrt(v2 + EPS) * p["g2"] + p["beta2"], 0.0)


if __name__ == "__main__":
    key = jax.random.PRNGKey(0)
    k_h, k_p = jax.random.split(key)

    # Small GIN-layer sized problem: 512 nodes, 64 -> 128 -> 64 features.
    # (64-wide feature dims exercise the 128-lane padding path; 512 rows -> 4 node tiles.)
    N, IN_DIM, HIDDEN_DIM, OUT_DIM = 512, 64, 128, 64
    h = jax.random.normal(k_h, (N, IN_DIM), jnp.float32)
    params = init_params(k_p, IN_DIM, HIDDEN_DIM, OUT_DIM)

    out = apply_node_func(h, params, tile_n=128)
    out = jax.block_until_ready(out)

    ref = reference(h, params)
    assert out.shape == (N, OUT_DIM)
    assert bool(jnp.all(jnp.isfinite(out)))
    assert jnp.allclose(out, ref, atol=1e-2, rtol=1e-2), "mismatch vs pure-JAX reference"
    print("KERNEL_OK")
</pallas_src>

<mosaic_0001>
module attributes {stable_mosaic.version = 11 : i64} {
  func.func @_linear_stats_kernel(%arg0: i32, %arg1: memref<128x128xbf16, #tpu.memory_space<vmem>>, %arg2: memref<128x128xbf16, #tpu.memory_space<vmem>>, %arg3: memref<1x128xf32, #tpu.memory_space<vmem>>, %arg4: memref<128x128xf32, #tpu.memory_space<vmem>>, %arg5: memref<1x2x128xf32, #tpu.memory_space<vmem>>) attributes {dimension_semantics = [#tpu.dimension_semantics<parallel>], iteration_bounds = array<i64: 4>, scalar_prefetch = 0 : i64, scratch_operands = 0 : i64, tpu.core_type = #tpu.core_type<tc>, window_params = [{transform_indices = @transform_0, window_bounds = array<i64: 128, 128>}, {pipeline_mode = #tpu.pipeline_mode<synchronous>, transform_indices = @transform_1, window_bounds = array<i64: 128, 128>}, {pipeline_mode = #tpu.pipeline_mode<synchronous>, transform_indices = @transform_2, window_bounds = array<i64: 1, 128>}, {transform_indices = @transform_3, window_bounds = array<i64: 128, 128>}, {transform_indices = @transform_4, window_bounds = array<i64: 1, 2, 128>}]} {
    %c0 = arith.constant 0 : index
    %c0_0 = arith.constant 0 : index
    %0 = vector.load %arg1[%c0, %c0_0] : memref<128x128xbf16, #tpu.memory_space<vmem>>, vector<128x128xbf16>
    %c0_1 = arith.constant 0 : index
    %c0_2 = arith.constant 0 : index
    %1 = vector.load %arg2[%c0_1, %c0_2] : memref<128x128xbf16, #tpu.memory_space<vmem>>, vector<128x128xbf16>
    %cst = arith.constant dense<0.000000e+00> : vector<128x128xf32>
    %2 = tpu.matmul %0, %1, %cst {dimension_numbers = #tpu.dot_dimension_numbers<[1], [0], [0], [1], [0, 0, 1, 1], [], []>} : vector<128x128xbf16>, vector<128x128xbf16>, vector<128x128xf32> -> vector<128x128xf32>
    %c0_3 = arith.constant 0 : index
    %c0_4 = arith.constant 0 : index
    %3 = vector.load %arg3[%c0_3, %c0_4] : memref<1x128xf32, #tpu.memory_space<vmem>>, vector<1x128xf32>
    %4 = vector.broadcast %3 : vector<1x128xf32> to vector<128x128xf32>
    %5 = arith.addf %2, %4 : vector<128x128xf32>
    %c0_5 = arith.constant 0 : index
    %c0_6 = arith.constant 0 : index
    %6 = vector.load %arg4[%c0_5, %c0_6] : memref<128x128xf32, #tpu.memory_space<vmem>>, vector<128x128xf32>
    tpu.vector_store %arg4[%c0_5, %c0_6], %5 {strides = array<i32>} : memref<128x128xf32, #tpu.memory_space<vmem>>, vector<128x128xf32>,
    %cst_7 = arith.constant dense<0.000000e+00> : vector<128xf32>
    %7 = vector.multi_reduction <add>, %5, %cst_7 [0] : vector<128x128xf32> to vector<128xf32>
    %8 = vector.shape_cast %7 : vector<128xf32> to vector<1x128xf32>
    %9 = arith.mulf %5, %5 : vector<128x128xf32>
    %cst_8 = arith.constant dense<0.000000e+00> : vector<128xf32>
    %10 = vector.multi_reduction <add>, %9, %cst_8 [0] : vector<128x128xf32> to vector<128xf32>
    %11 = vector.shape_cast %10 : vector<128xf32> to vector<1x128xf32>
    %12 = tpu.concatenate %8, %11 in 0 : vector<1x128xf32>, vector<1x128xf32> -> vector<2x128xf32>
    %13 = vector.shape_cast %12 : vector<2x128xf32> to vector<1x2x128xf32>
    %c0_9 = arith.constant 0 : index
    %c0_10 = arith.constant 0 : index
    %c0_11 = arith.constant 0 : index
    %14 = vector.load %arg5[%c0_9, %c0_10, %c0_11] : memref<1x2x128xf32, #tpu.memory_space<vmem>>, vector<1x2x128xf32>
    tpu.vector_store %arg5[%c0_9, %c0_10, %c0_11], %13 {strides = array<i32>} : memref<1x2x128xf32, #tpu.memory_space<vmem>>, vector<1x2x128xf32>,
    return
  }
  func.func @transform_0(%arg0: i32) -> (i32, i32) {
    %c0_i32 = arith.constant 0 : i32
    %c0_i32_0 = arith.constant 0 : i32
    return %arg0, %c0_i32 : i32, i32
  }
  func.func @transform_1(%arg0: i32) -> (i32, i32) {
    %c0_i32 = arith.constant 0 : i32
    %c0_i32_0 = arith.constant 0 : i32
    %c0_i32_1 = arith.constant 0 : i32
    return %c0_i32, %c0_i32_0 : i32, i32
  }
  func.func @transform_2(%arg0: i32) -> (i32, i32) {
    %c0_i32 = arith.constant 0 : i32
    %c0_i32_0 = arith.constant 0 : i32
    %c0_i32_1 = arith.constant 0 : i32
    return %c0_i32, %c0_i32_0 : i32, i32
  }
  func.func @transform_3(%arg0: i32) -> (i32, i32) {
    %c0_i32 = arith.constant 0 : i32
    %c0_i32_0 = arith.constant 0 : i32
    return %arg0, %c0_i32 : i32, i32
  }
  func.func @transform_4(%arg0: i32) -> (i32, i32, i32) {
    %c0_i32 = arith.constant 0 : i32
    %c0_i32_0 = arith.constant 0 : i32
    %c0_i32_1 = arith.constant 0 : i32
    return %arg0, %c0_i32, %c0_i32_0 : i32, i32, i32
  }
}

</mosaic_0001>

<llo_original>
// kernel: tpu_custom_call.1
$region0: #{tpu_custom_call.1}
  #allocation0 [shape = 'u32[]', space=smem, size = 0x4, offset = 0x4, fixed_abs, tag = 'smem constant byte address 0x4 - core index']
  #allocation1 [shape = 'u32[144,128]{1,0:T(1,128)}', space=vmem, size = 0x12000, scoped, tag = 'internal scratch']
  %s0 = inlined_call_operand.hbm [shape: bf16[512,128], index: 0, kind: input, shape index: {}]
  %s1 = inlined_call_operand.hbm [shape: bf16[128,128], index: 1, kind: input, shape index: {}]
  %s2 = inlined_call_operand.vmem [shape: f32[1,128], index: 2, kind: input, shape index: {}]
  %s3 = inlined_call_operand.hbm [shape: f32[512,128], index: 3, kind: output, shape index: {0}]
  %s4 = inlined_call_operand.hbm [shape: f32[4,2,128], index: 4, kind: output, shape index: {1}]
  %5 = xla_tuple %s3, %s4
  %s6 = sld [smem:[#allocation0]]
  $region61: #{tpu_custom_call.1} parent=0
    _
  %s8 = ssub.s32 1, %s6
  %s9 = scalar_select 0, %s8, %s6
  $region1: #{tpu_custom_call.1} parent=0
    #allocation2 [shape = 'u8[65536]{0}', space=vmem, size = 0x10000, scoped, tag = 'input window, operand 0']
    #allocation3 [shape = 's32[2]{0}', space=sflag, size = 0x8, scoped, tag = 'scoped memory for tpu_custom_call.1']
    #allocation4 [shape = 's32[2]{0}', space=sflag, size = 0x8, scoped, tag = 'scoped memory for tpu_custom_call.1']
    #allocation5 [shape = 'u8[32768]{0}', space=vmem, size = 0x8000, scoped, tag = 'input window, operand 1, single buffered']
    #allocation6 [shape = 's32[1]{0}', space=sflag, size = 0x4, scoped, tag = 'scoped memory for tpu_custom_call.1']
    #allocation7 [shape = 'u8[131072]{0}', space=vmem, size = 0x20000, scoped, tag = 'output window, operand 0']
    #allocation8 [shape = 'u8[2048]{0}', space=vmem, size = 0x800, scoped, tag = 'output window, operand 1']
    #allocation9 [shape = 's32[2]{0}', space=sflag, size = 0x8, scoped, tag = 'scoped memory for tpu_custom_call.1']
    %10 = vsyncpa [#allocation3], 0
    %s11 = scalar_lea.sflag [#allocation3], 1
    %12 = vsyncpa %s11, 0
    %13 = vsyncpa [#allocation6], 0
    %14 = vsyncpa [#allocation4], 0
    %s15 = scalar_lea.sflag [#allocation4], 1
    %16 = vsyncpa %s15, 0
    %17 = vsyncpa [#allocation9], 0
    %s18 = scalar_lea.sflag [#allocation9], 1
    %19 = vsyncpa %s18, 0
    loop: start=0, step=1, limit=6
    $region2: #{tpu_custom_call.1} parent=1 // loop_pre_header
      _
    $region3: #{tpu_custom_call.1} parent=1 // loop_header
      %s21 = sphi 0, %s25
      %p22 = scmp.ge.s32.totalorder %s21, 6
      %s31 = sphi 0, %s33
      %s34 = sphi 0, %s31
      %s35 = sphi 0, %s34
      %s51 = sphi 0, %s35
      %s55 = sphi 0, %s55
      %s57 = sphi 0, %s55
      %s58 = sphi 0, %s57
      %s72 = sphi 0, %s58
      %s76 = sphi 0, %s76
      %s78 = sphi 0, %s76
      %s79 = sphi 0, %s78
      %s93 = sphi 0, %s79
      %s99 = sphi 0, %s101
      %s102 = sphi 0, %s99
      %s103 = sphi 0, %s102
      %s119 = sphi 0, %s103
      %s125 = sphi 0, %s127
      %s128 = sphi 0, %s125
      %s129 = sphi 0, %s128
      %s145 = sphi 0, %s129
    $region4: #{tpu_custom_call.1} parent=1 // loop_header_branch
      %24 = sbr.rel (%p22) target = $region8
    $region5: #{tpu_custom_call.1} parent=1 // loop_body
      %s26 = ssub.s32 %s21, 1
      %s27 = ssub.s32 %s21, 2
      %s28 = sadd.s32 %s21, 1
      %s29 = ssub.s32 %s21, %s28
      %p30 = scmp.eq.s32.totalorder %s29, 0
      %s32 = sadd.s32 %s31, 1
      %s33 = scalar_select %p30, %s31, %s32
      %p36 = pneg %p30
      %p37 = scmp.eq.s32.totalorder %s21, 3
      %p38 = por %p36, %p37
      %p39 = scmp.ne.s32.totalorder %s31, %s34
      %p40 = scmp.eq.s32.totalorder %s21, 0
      %p41 = por %p39, %p40
      %p42 = scmp.ne.s32.totalorder %s31, %s34
      %p43 = scmp.eq.s32.totalorder %s26, 3
      %p44 = por %p42, %p43
      %p45 = scmp.ne.s32.totalorder %s34, %s35
      %p46 = scmp.eq.s32.totalorder %s26, 0
      %p47 = por %p45, %p46
      %p48 = scmp.ne.s32.totalorder %s34, %s35
      %p49 = scmp.eq.s32.totalorder %s27, 3
      %p50 = por %p48, %p49
      %p52 = scmp.ne.s32.totalorder %s35, %s51
      %p53 = scmp.eq.s32.totalorder %s27, 0
      %p54 = por %p52, %p53
      %s56 = sadd.s32 %s55, 1
      %p59 = scmp.eq.s32.totalorder %s21, 3
      %p60 = scmp.ne.s32.totalorder %s55, %s57
      %p61 = scmp.eq.s32.totalorder %s21, 0
      %p62 = por %p60, %p61
      %p63 = scmp.ne.s32.totalorder %s55, %s57
      %p64 = scmp.eq.s32.totalorder %s26, 3
      %p65 = por %p63, %p64
      %p66 = scmp.ne.s32.totalorder %s57, %s58
      %p67 = scmp.eq.s32.totalorder %s26, 0
      %p68 = por %p66, %p67
      %p69 = scmp.ne.s32.totalorder %s57, %s58
      %p70 = scmp.eq.s32.totalorder %s27, 3
      %p71 = por %p69, %p70
      %p73 = scmp.ne.s32.totalorder %s58, %s72
      %p74 = scmp.eq.s32.totalorder %s27, 0
      %p75 = por %p73, %p74
      %s77 = sadd.s32 %s76, 1
      %p80 = scmp.eq.s32.totalorder %s21, 3
      %p81 = scmp.ne.s32.totalorder %s76, %s78
      %p82 = scmp.eq.s32.totalorder %s21, 0
      %p83 = por %p81, %p82
      %p84 = scmp.ne.s32.totalorder %s76, %s78
      %p85 = scmp.eq.s32.totalorder %s26, 3
      %p86 = por %p84, %p85
      %p87 = scmp.ne.s32.totalorder %s78, %s79
      %p88 = scmp.eq.s32.totalorder %s26, 0
      %p89 = por %p87, %p88
      %p90 = scmp.ne.s32.totalorder %s78, %s79
      %p91 = scmp.eq.s32.totalorder %s27, 3
      %p92 = por %p90, %p91
      %p94 = scmp.ne.s32.totalorder %s79, %s93
      %p95 = scmp.eq.s32.totalorder %s27, 0
      %p96 = por %p94, %p95
      %s97 = ssub.s32 %s21, %s28
      %p98 = scmp.eq.s32.totalorder %s97, 0
      %s100 = sadd.s32 %s99, 1
      %s101 = scalar_select %p98, %s99, %s100
      %p104 = pneg %p98
      %p105 = scmp.eq.s32.totalorder %s21, 3
      %p106 = por %p104, %p105
      %p107 = scmp.ne.s32.totalorder %s99, %s102
      %p108 = scmp.eq.s32.totalorder %s21, 0
      %p109 = por %p107, %p108
      %p110 = scmp.ne.s32.totalorder %s99, %s102
      %p111 = scmp.eq.s32.totalorder %s26, 3
      %p112 = por %p110, %p111
      %p113 = scmp.ne.s32.totalorder %s102, %s103
      %p114 = scmp.eq.s32.totalorder %s26, 0
      %p115 = por %p113, %p114
      %p116 = scmp.ne.s32.totalorder %s102, %s103
      %p117 = scmp.eq.s32.totalorder %s27, 3
      %p118 = por %p116, %p117
      %p120 = scmp.ne.s32.totalorder %s103, %s119
      %p121 = scmp.eq.s32.totalorder %s27, 0
      %p122 = por %p120, %p121
      %s123 = ssub.s32 %s21, %s28
      %p124 = scmp.eq.s32.totalorder %s123, 0
      %s126 = sadd.s32 %s125, 1
      %s127 = scalar_select %p124, %s125, %s126
      %p130 = pneg %p124
      %p131 = scmp.eq.s32.totalorder %s21, 3
      %p132 = por %p130, %p131
      %p133 = scmp.ne.s32.totalorder %s125, %s128
      %p134 = scmp.eq.s32.totalorder %s21, 0
      %p135 = por %p133, %p134
      %p136 = scmp.ne.s32.totalorder %s125, %s128
      %p137 = scmp.eq.s32.totalorder %s26, 3
      %p138 = por %p136, %p137
      %p139 = scmp.ne.s32.totalorder %s128, %s129
      %p140 = scmp.eq.s32.totalorder %s26, 0
      %p141 = por %p139, %p140
      %p142 = scmp.ne.s32.totalorder %s128, %s129
      %p143 = scmp.eq.s32.totalorder %s27, 3
      %p144 = por %p142, %p143
      %p146 = scmp.ne.s32.totalorder %s129, %s145
      %p147 = scmp.eq.s32.totalorder %s27, 0
      %p148 = por %p146, %p147
      %p149 = scmp.le.s32.totalorder 1, %s21
      %p150 = scmp.lt.s32.totalorder %s21, 5
      %p151 = pnand %p149, %p150
      %p152 = pneg %p151
      // Predicated region
      $region9: #{tpu_custom_call.1} parent=5 // pred_check
        _
      $region10: #{tpu_custom_call.1} parent=5 // pred_check_branch
        %154 = sbr.rel (%p151) target = $region12
      $region11: #{tpu_custom_call.1} parent=5 // pred_region
        %s155 = ssub.s32 %s21, 1
        // Predicated region
        $region13: #{tpu_custom_call.1} parent=11 // pred_check
          %p156 = pneg %p68
        $region14: #{tpu_custom_call.1} parent=11 // pred_check_branch
          %158 = sbr.rel (%p156) target = $region16
        $region15: #{tpu_custom_call.1} parent=11 // pred_region
          %s160 = ssub.s32 1024, 1024
          %161 = vsyncadd [#allocation6], %s160
          %s162 = sshll.u32 [#allocation5], 4
          %s163 = int_to_ptr.vmem [resolvable:$true] %s162
          %168 = dma.hbm_to_vmem [thread:$0]  %s1, 1024, %s163, [#allocation6], 64, 64, 4
        $region16: #{tpu_custom_call.1} parent=11 // pred_fallthru
          _
        // Predicated region
        $region17: #{tpu_custom_call.1} parent=11 // pred_check
          %p169 = pneg %p89
        $region18: #{tpu_custom_call.1} parent=11 // pred_check_branch
          %171 = sbr.rel (%p169) target = $region20
        $region19: #{tpu_custom_call.1} parent=11 // pred_region
          _
        $region20: #{tpu_custom_call.1} parent=11 // pred_fallthru
          _
      $region12: #{tpu_custom_call.1} parent=5 // pred_fallthru
        _
      %p172 = scmp.lt.s32.totalorder %s21, 4
      // Predicated region
      $region21: #{tpu_custom_call.1} parent=5 // pred_check
        %p173 = pneg %p172
      $region22: #{tpu_custom_call.1} parent=5 // pred_check_branch
        %175 = sbr.rel (%p173) target = $region24
      $region23: #{tpu_custom_call.1} parent=5 // pred_region
        // Predicated region
        $region25: #{tpu_custom_call.1} parent=23 // pred_check
          %p176 = pneg %p41
        $region26: #{tpu_custom_call.1} parent=23 // pred_check_branch
          %178 = sbr.rel (%p176) target = $region28
        $region27: #{tpu_custom_call.1} parent=23 // pred_region
          %s179 = sand.u32 %s31, 1
          %s180 = scalar_lea.sflag [#allocation3], %s179
          %s181 = sand.u32 %s31, 1
          %s182 = smul.addr %s181, 64
          %s183 = scalar_lea.vmem [#allocation2], %s182
          %s184 = smul.u32 16, %s21
          %s186 = ssub.s32 1024, 1024
          %187 = vsyncadd %s180, %s186
          %s188 = smul.addr %s184, 64
          %s189 = scalar_lea.hbm %s0, %s188
          %s190 = sshll.u32 %s183, 4
          %s191 = int_to_ptr.vmem [resolvable:$true] %s190
          %196 = dma.hbm_to_vmem [thread:$0]  %s189, 1024, %s191, %s180, 64, 64, 4
        $region28: #{tpu_custom_call.1} parent=23 // pred_fallthru
          _
      $region24: #{tpu_custom_call.1} parent=5 // pred_fallthru
        _
      %p197 = scmp.le.s32.totalorder 1, %s21
      %p198 = scmp.lt.s32.totalorder %s21, 5
      %p199 = pnand %p197, %p198
      %p200 = pneg %p199
      // Predicated region
      $region29: #{tpu_custom_call.1} parent=5 // pred_check
        _
      $region30: #{tpu_custom_call.1} parent=5 // pred_check_branch
        %202 = sbr.rel (%p199) target = $region32
      $region31: #{tpu_custom_call.1} parent=5 // pred_region
        %s203 = ssub.s32 %s21, 1
        %s204 = sand.u32 %s34, 1
        %s205 = scalar_lea.sflag [#allocation3], %s204
        %s206 = sand.u32 %s34, 1
        %s207 = smul.addr %s206, 64
        %s208 = scalar_lea.vmem [#allocation2], %s207
        // Predicated region
        $region33: #{tpu_custom_call.1} parent=31 // pred_check
          %p209 = pneg %p47
        $region34: #{tpu_custom_call.1} parent=31 // pred_check_branch
          %211 = sbr.rel (%p209) target = $region36
        $region35: #{tpu_custom_call.1} parent=31 // pred_region
          %212 = dma.done %s205, 1024
        $region36: #{tpu_custom_call.1} parent=31 // pred_fallthru
          _
        // Predicated region
        $region37: #{tpu_custom_call.1} parent=31 // pred_check
          %p213 = pneg %p68
        $region38: #{tpu_custom_call.1} parent=31 // pred_check_branch
          %215 = sbr.rel (%p213) target = $region40
        $region39: #{tpu_custom_call.1} parent=31 // pred_region
          %216 = dma.done [#allocation6], 1024
        $region40: #{tpu_custom_call.1} parent=31 // pred_fallthru
          _
        %s217 = sand.u32 %s34, 1
        %s218 = scalar_lea.sflag [#allocation3], %s217
        %s219 = sand.u32 %s34, 1
        %s220 = smul.addr %s219, 64
        %s221 = scalar_lea.vmem [#allocation2], %s220
        %p222 = pneg %p47
        %p223 = pneg %p44
        %p224 = pneg %p68
        %p225 = pneg %p65
        %p226 = pneg %p89
        %p227 = pneg %p86
        %p228 = pneg %p115
        %p229 = pneg %p112
        %s230 = sand.u32 %s102, 1
        %s231 = scalar_lea.sflag [#allocation4], %s230
        %s232 = sand.u32 %s102, 1
        %s233 = smul.addr %s232, 128
        %s234 = scalar_lea.vmem [#allocation7], %s233
        %p235 = pneg %p141
        %p236 = pneg %p138
        %s237 = sand.u32 %s128, 1
        %s238 = scalar_lea.sflag [#allocation9], %s237
        %s239 = sand.u32 %s128, 1
        %s240 = smul.addr %s239, 2
        %s241 = scalar_lea.vmem [#allocation8], %s240
        %s242 = smul.u32 16, %s26
        %s243 = smul.u32 16, %s26
        %v245 = vld [vmem:[%s208] sm:$0xf]
        %v246 = vld [vmem:[%s208 + $0x4] sm:$0xf]
        %v247 = vld [vmem:[%s208 + $0x8] sm:$0xf]
        %v248 = vld [vmem:[%s208 + $0xc] sm:$0xf]
        %v249 = vld [vmem:[%s208 + $0x10] sm:$0xf]
        %v250 = vld [vmem:[%s208 + $0x14] sm:$0xf]
        %v251 = vld [vmem:[%s208 + $0x18] sm:$0xf]
        %v252 = vld [vmem:[%s208 + $0x1c] sm:$0xf]
        %v253 = vld [vmem:[%s208 + $0x20] sm:$0xf]
        %v254 = vld [vmem:[%s208 + $0x24] sm:$0xf]
        %v255 = vld [vmem:[%s208 + $0x28] sm:$0xf]
        %v256 = vld [vmem:[%s208 + $0x2c] sm:$0xf]
        %v257 = vld [vmem:[%s208 + $0x30] sm:$0xf]
        %v258 = vld [vmem:[%s208 + $0x34] sm:$0xf]
        %v259 = vld [vmem:[%s208 + $0x38] sm:$0xf]
        %v260 = vld [vmem:[%s208 + $0x3c] sm:$0xf]
        %v261 = vld [vmem:[#allocation5] sm:$0xf]
        %v262 = vld [vmem:[#allocation5 + $0x4] sm:$0xf]
        %v263 = vld [vmem:[#allocation5 + $0x8] sm:$0xf]
        %v264 = vld [vmem:[#allocation5 + $0xc] sm:$0xf]
        %v265 = vld [vmem:[#allocation5 + $0x10] sm:$0xf]
        %v266 = vld [vmem:[#allocation5 + $0x14] sm:$0xf]
        %v267 = vld [vmem:[#allocation5 + $0x18] sm:$0xf]
        %v268 = vld [vmem:[#allocation5 + $0x1c] sm:$0xf]
        %v269 = vld [vmem:[#allocation5 + $0x20] sm:$0xf]
        %v270 = vld [vmem:[#allocation5 + $0x24] sm:$0xf]
        %v271 = vld [vmem:[#allocation5 + $0x28] sm:$0xf]
        %v272 = vld [vmem:[#allocation5 + $0x2c] sm:$0xf]
        %v273 = vld [vmem:[#allocation5 + $0x30] sm:$0xf]
        %v274 = vld [vmem:[#allocation5 + $0x34] sm:$0xf]
        %v275 = vld [vmem:[#allocation5 + $0x38] sm:$0xf]
        %v276 = vld [vmem:[#allocation5 + $0x3c] sm:$0xf]
        %v277 = vld [vmem:[%s2] sm:$0x1]
        %v279 = vlaneseq
        %v280 = vshrl.u32 %v279, 7
        %v281 = vsub.s32 0, %v280
        %v282 = vrot.slane %v277, %v281
        %v300 = vunpack.c.l.b16 %v245
        %v301 = vunpack.c.l.b16 %v246
        %v302 = vunpack.c.l.b16 %v247
        %v303 = vunpack.c.l.b16 %v248
        %v304 = vunpack.c.l.b16 %v249
        %v305 = vunpack.c.l.b16 %v250
        %v306 = vunpack.c.l.b16 %v251
        %v307 = vunpack.c.l.b16 %v252
        %v308 = vunpack.c.l.b16 %v253
        %v309 = vunpack.c.l.b16 %v254
        %v310 = vunpack.c.l.b16 %v255
        %v311 = vunpack.c.l.b16 %v256
        %v312 = vunpack.c.l.b16 %v257
        %v313 = vunpack.c.l.b16 %v258
        %v314 = vunpack.c.l.b16 %v259
        %v315 = vunpack.c.l.b16 %v260
        %v316 = vpack.c.b16 %v301, %v300
        %v317 = vpack.c.b16 %v303, %v302
        %v318 = vpack.c.b16 %v305, %v304
        %v319 = vpack.c.b16 %v307, %v306
        %v320 = vpack.c.b16 %v309, %v308
        %v321 = vpack.c.b16 %v311, %v310
        %v322 = vpack.c.b16 %v313, %v312
        %v323 = vpack.c.b16 %v315, %v314
        %v348 = vunpack.c.l.b16 %v261
        %v349 = vunpack.c.l.b16 %v262
        %v350 = vunpack.c.l.b16 %v263
        %v351 = vunpack.c.l.b16 %v264
        %v352 = vunpack.c.l.b16 %v265
        %v353 = vunpack.c.l.b16 %v266
        %v354 = vunpack.c.l.b16 %v267
        %v355 = vunpack.c.l.b16 %v268
        %v356 = vunpack.c.l.b16 %v269
        %v357 = vunpack.c.l.b16 %v270
        %v358 = vunpack.c.l.b16 %v271
        %v359 = vunpack.c.l.b16 %v272
        %v360 = vunpack.c.l.b16 %v273
        %v361 = vunpack.c.l.b16 %v274
        %v362 = vunpack.c.l.b16 %v275
        %v363 = vunpack.c.l.b16 %v276
        %v364 = vpack.c.b16 %v349, %v348
        %v365 = vpack.c.b16 %v351, %v350
        %v366 = vpack.c.b16 %v353, %v352
        %v367 = vpack.c.b16 %v355, %v354
        %v368 = vpack.c.b16 %v357, %v356
        %v369 = vpack.c.b16 %v359, %v358
        %v370 = vpack.c.b16 %v361, %v360
        %v371 = vpack.c.b16 %v363, %v362
        %380 = vmatprep.subr.bf16.mxu0 0
        %381 = vmatpush1.bf16.msra.mxu0 %v371
        %382 = vmatprep.subr.bf16.mxu0 0
        %383 = vmatpush1.bf16.msra.mxu0 %v370
        %384 = vmatprep.subr.bf16.mxu0 0
        %385 = vmatpush1.bf16.msra.mxu0 %v369
        %386 = vmatprep.subr.bf16.mxu0 0
        %387 = vmatpush1.bf16.msra.mxu0 %v368
        %388 = vmatprep.subr.bf16.mxu0 0
        %389 = vmatpush1.bf16.msra.mxu0 %v367
        %390 = vmatprep.subr.bf16.mxu0 0
        %391 = vmatpush1.bf16.msra.mxu0 %v366
        %392 = vmatprep.subr.bf16.mxu0 0
        %393 = vmatpush1.bf16.msra.mxu0 %v365
        %394 = vmatprep.subr.bf16.mxu0 0
        %395 = vmatpush1.bf16.msra.mxu0 %v364
        %396 = vmatprep.subr.bf16.mxu0 0
        %397 = vmatpush2.bf16.msra.mxu0 0
        %398 = vmatprep.subr.bf16.mxu0 0
        %399 = vmatpush2.bf16.msra.mxu0 0
        %400 = vmatprep.subr.bf16.mxu0 0
        %401 = vmatpush2.bf16.msra.mxu0 0
        %402 = vmatprep.subr.bf16.mxu0 0
        %403 = vmatpush2.bf16.msra.mxu0 0
        %404 = vmatprep.subr.bf16.mxu0 0
        %405 = vmatpush2.bf16.msra.mxu0 0
        %406 = vmatprep.subr.bf16.mxu0 0
        %407 = vmatpush2.bf16.msra.mxu0 0
        %408 = vmatprep.subr.bf16.mxu0 0
        %409 = vmatpush2.bf16.msra.mxu0 0
        %410 = vmatprep.subr.bf16.mxu0 0
        %411 = vmatpush2.bf16.msra.mxu0 0
        %412 = vmatprep.mubr.bf16.mxu0 0
        %413 = vmatmul.mubr.bf16.gmra.mxu0 %v316
        %v414 = vpop.f32.mrf.mxu0
        %v415 = vadd.f32 %v282, %v414
        %v416 = vpop.f32.mrf.mxu0
        %v417 = vpop.f32.mrf.mxu0
        %v418 = vadd.f32 %v282, %v417
        %v419 = vpop.f32.mrf.mxu0
        %420 = vmatprep.mubr.bf16.mxu0 0
        %421 = vmatmul.mubr.bf16.gmra.mxu0 %v317
        %v422 = vpop.f32.mrf.mxu0
        %v423 = vadd.f32 %v282, %v422
        %v424 = vpop.f32.mrf.mxu0
        %v425 = vpop.f32.mrf.mxu0
        %v426 = vadd.f32 %v282, %v425
        %v427 = vpop.f32.mrf.mxu0
        %428 = vmatprep.mubr.bf16.mxu0 0
        %429 = vmatmul.mubr.bf16.gmra.mxu0 %v318
        %v430 = vpop.f32.mrf.mxu0
        %v431 = vadd.f32 %v282, %v430
        %v432 = vpop.f32.mrf.mxu0
        %v433 = vpop.f32.mrf.mxu0
        %v434 = vadd.f32 %v282, %v433
        %v435 = vpop.f32.mrf.mxu0
        %436 = vmatprep.mubr.bf16.mxu0 0
        %437 = vmatmul.mubr.bf16.gmra.mxu0 %v319
        %v438 = vpop.f32.mrf.mxu0
        %v439 = vadd.f32 %v282, %v438
        %v440 = vpop.f32.mrf.mxu0
        %v441 = vpop.f32.mrf.mxu0
        %v442 = vadd.f32 %v282, %v441
        %v443 = vpop.f32.mrf.mxu0
        %444 = vmatprep.mubr.bf16.mxu0 0
        %445 = vmatmul.mubr.bf16.gmra.mxu0 %v320
        %v446 = vpop.f32.mrf.mxu0
        %v447 = vadd.f32 %v282, %v446
        %v448 = vpop.f32.mrf.mxu0
        %v449 = vpop.f32.mrf.mxu0
        %v450 = vadd.f32 %v282, %v449
        %v451 = vpop.f32.mrf.mxu0
        %452 = vmatprep.mubr.bf16.mxu0 0
        %453 = vmatmul.mubr.bf16.gmra.mxu0 %v321
        %v454 = vpop.f32.mrf.mxu0
        %v455 = vadd.f32 %v282, %v454
        %v456 = vpop.f32.mrf.mxu0
        %v457 = vpop.f32.mrf.mxu0
        %v458 = vadd.f32 %v282, %v457
        %v459 = vpop.f32.mrf.mxu0
        %460 = vmatprep.mubr.bf16.mxu0 0
        %461 = vmatmul.mubr.bf16.gmra.mxu0 %v322
        %v462 = vpop.f32.mrf.mxu0
        %v463 = vadd.f32 %v282, %v462
        %v464 = vpop.f32.mrf.mxu0
        %v465 = vpop.f32.mrf.mxu0
        %v466 = vadd.f32 %v282, %v465
        %v467 = vpop.f32.mrf.mxu0
        %468 = vmatprep.mubr.bf16.mxu0 0
        %469 = vmatmul.mubr.bf16.gmra.mxu0 %v323
        %v470 = vpop.f32.mrf.mxu0
        %v471 = vadd.f32 %v282, %v470
        %v472 = vpop.f32.mrf.mxu0
        %v473 = vpop.f32.mrf.mxu0
        %v474 = vadd.f32 %v282, %v473
        %v475 = vpop.f32.mrf.mxu0
        %476 = vdwg.mxu0
        %477 = vst [vmem:[%s234] sm:$0xff] %v415
        %478 = vst [vmem:[%s234 + $0x8] sm:$0xff] %v418
        %479 = vst [vmem:[%s234 + $0x10] sm:$0xff] %v423
        %480 = vst [vmem:[%s234 + $0x18] sm:$0xff] %v426
        %481 = vst [vmem:[%s234 + $0x20] sm:$0xff] %v431
        %482 = vst [vmem:[%s234 + $0x28] sm:$0xff] %v434
        %483 = vst [vmem:[%s234 + $0x30] sm:$0xff] %v439
        %484 = vst [vmem:[%s234 + $0x38] sm:$0xff] %v442
        %485 = vst [vmem:[%s234 + $0x40] sm:$0xff] %v447
        %486 = vst [vmem:[%s234 + $0x48] sm:$0xff] %v450
        %487 = vst [vmem:[%s234 + $0x50] sm:$0xff] %v455
        %488 = vst [vmem:[%s234 + $0x58] sm:$0xff] %v458
        %489 = vst [vmem:[%s234 + $0x60] sm:$0xff] %v463
        %490 = vst [vmem:[%s234 + $0x68] sm:$0xff] %v466
        %491 = vst [vmem:[%s234 + $0x70] sm:$0xff] %v471
        %492 = vst [vmem:[%s234 + $0x78] sm:$0xff] %v474
        %v493 = vadd.f32 %v415, %v418
        %v494 = vadd.f32 %v493, %v423
        %v495 = vadd.f32 %v494, %v426
        %v496 = vadd.f32 %v495, %v431
        %v497 = vadd.f32 %v496, %v434
        %v498 = vadd.f32 %v497, %v439
        %v499 = vadd.f32 %v498, %v442
        %v500 = vadd.f32 %v499, %v447
        %v501 = vadd.f32 %v500, %v450
        %v502 = vadd.f32 %v501, %v455
        %v503 = vadd.f32 %v502, %v458
        %v504 = vadd.f32 %v503, %v463
        %v505 = vadd.f32 %v504, %v466
        %v506 = vadd.f32 %v505, %v471
        %v507 = vadd.f32 %v506, %v474
        %v508 = vrot.slane %v507, 4
        %v509 = vadd.f32 %v507, %v508
        %v510 = vrot.slane %v509, 2
        %v511 = vadd.f32 %v509, %v510
        %v512 = vrot.slane %v511, 1
        %v513 = vadd.f32 %v511, %v512
        %v514 = vmul.f32 %v415, %v415
        %v515 = vmul.f32 %v418, %v418
        %v516 = vmul.f32 %v423, %v423
        %v517 = vmul.f32 %v426, %v426
        %v518 = vmul.f32 %v431, %v431
        %v519 = vmul.f32 %v434, %v434
        %v520 = vmul.f32 %v439, %v439
        %v521 = vmul.f32 %v442, %v442
        %v522 = vmul.f32 %v447, %v447
        %v523 = vmul.f32 %v450, %v450
        %v524 = vmul.f32 %v455, %v455
        %v525 = vmul.f32 %v458, %v458
        %v526 = vmul.f32 %v463, %v463
        %v527 = vmul.f32 %v466, %v466
        %v528 = vmul.f32 %v471, %v471
        %v529 = vmul.f32 %v474, %v474
        %v530 = vadd.f32 %v514, %v515
        %v531 = vadd.f32 %v530, %v516
        %v532 = vadd.f32 %v531, %v517
        %v533 = vadd.f32 %v532, %v518
        %v534 = vadd.f32 %v533, %v519
        %v535 = vadd.f32 %v534, %v520
        %v536 = vadd.f32 %v535, %v521
        %v537 = vadd.f32 %v536, %v522
        %v538 = vadd.f32 %v537, %v523
        %v539 = vadd.f32 %v538, %v524
        %v540 = vadd.f32 %v539, %v525
        %v541 = vadd.f32 %v540, %v526
        %v542 = vadd.f32 %v541, %v527
        %v543 = vadd.f32 %v542, %v528
        %v544 = vadd.f32 %v543, %v529
        %v545 = vrot.slane %v544, 4
        %v546 = vadd.f32 %v544, %v545
        %v547 = vrot.slane %v546, 2
        %v548 = vadd.f32 %v546, %v547
        %v549 = vrot.slane %v548, 1
        %v550 = vadd.f32 %v548, %v549
        %vm551 = vcmask 1040384
        %v552 = vsel %vm551, %v513, %v550
        %553 = vst [vmem:[%s241] sm:$0x3] %v552
        %s554 = sand.u32 %s102, 1
        %s555 = scalar_lea.sflag [#allocation4], %s554
        %s556 = sand.u32 %s102, 1
        %s557 = smul.addr %s556, 128
        %s558 = scalar_lea.vmem [#allocation7], %s557
        %s559 = sand.u32 %s128, 1
        %s560 = scalar_lea.sflag [#allocation9], %s559
        %s561 = sand.u32 %s128, 1
        %s562 = smul.addr %s561, 2
        %s563 = scalar_lea.vmem [#allocation8], %s562
        // Predicated region
        $region41: #{tpu_custom_call.1} parent=31 // pred_check
          %p564 = pneg %p112
        $region42: #{tpu_custom_call.1} parent=31 // pred_check_branch
          %566 = sbr.rel (%p564) target = $region44
        $region43: #{tpu_custom_call.1} parent=31 // pred_region
          %s567 = smul.u32 16, %s26
          %s569 = ssub.s32 2048, 2048
          %570 = vsyncadd %s555, %s569
          %s571 = smul.addr %s567, 128
          %s572 = scalar_lea.hbm %s3, %s571
          %s573 = sshll.u32 %s558, 4
          %s574 = int_to_ptr.vmem [resolvable:$true] %s573
          %579 = dma.vmem_to_hbm [thread:$0]  %s574, 2048, %s572, %s555, 128, 128, 8
        $region44: #{tpu_custom_call.1} parent=31 // pred_fallthru
          _
        // Predicated region
        $region45: #{tpu_custom_call.1} parent=31 // pred_check
          %p580 = pneg %p138
        $region46: #{tpu_custom_call.1} parent=31 // pred_check_branch
          %582 = sbr.rel (%p580) target = $region48
        $region47: #{tpu_custom_call.1} parent=31 // pred_region
          %s584 = ssub.s32 32, 32
          %585 = vsyncadd %s560, %s584
          %s586 = smul.addr %s26, 32
          %s587 = scalar_lea.hbm %s4, %s586
          %s589 = sshll.u32 %s563, 4
          %s590 = int_to_ptr.vmem [resolvable:$true] %s589
          %592 = dma.vmem_to_hbm [thread:$0]  %s590, 32, %s587, %s560
        $region48: #{tpu_custom_call.1} parent=31 // pred_fallthru
          _
      $region32: #{tpu_custom_call.1} parent=5 // pred_fallthru
        _
      %p593 = scmp.le.s32.totalorder 2, %s21
      // Predicated region
      $region49: #{tpu_custom_call.1} parent=5 // pred_check
        %p594 = pneg %p593
      $region50: #{tpu_custom_call.1} parent=5 // pred_check_branch
        %596 = sbr.rel (%p594) target = $region52
      $region51: #{tpu_custom_call.1} parent=5 // pred_region
        %s597 = ssub.s32 %s21, 2
        // Predicated region
        $region53: #{tpu_custom_call.1} parent=51 // pred_check
          %p598 = pneg %p118
        $region54: #{tpu_custom_call.1} parent=51 // pred_check_branch
          %600 = sbr.rel (%p598) target = $region56
        $region55: #{tpu_custom_call.1} parent=51 // pred_region
          %s601 = sand.u32 %s103, 1
          %s602 = scalar_lea.sflag [#allocation4], %s601
          %s603 = sand.u32 %s103, 1
          %s604 = smul.addr %s603, 128
          %s605 = scalar_lea.vmem [#allocation7], %s604
          %606 = dma.done %s602, 2048
        $region56: #{tpu_custom_call.1} parent=51 // pred_fallthru
          _
        // Predicated region
        $region57: #{tpu_custom_call.1} parent=51 // pred_check
          %p607 = pneg %p144
        $region58: #{tpu_custom_call.1} parent=51 // pred_check_branch
          %609 = sbr.rel (%p607) target = $region60
        $region59: #{tpu_custom_call.1} parent=51 // pred_region
          %s610 = sand.u32 %s129, 1
          %s611 = scalar_lea.sflag [#allocation9], %s610
          %s612 = sand.u32 %s129, 1
          %s613 = smul.addr %s612, 2
          %s614 = scalar_lea.vmem [#allocation8], %s613
          %615 = dma.done %s611, 32
        $region60: #{tpu_custom_call.1} parent=51 // pred_fallthru
          _
      $region52: #{tpu_custom_call.1} parent=5 // pred_fallthru
        _
    $region6: #{tpu_custom_call.1} parent=1 // loop_footer
      %s25 = sadd.s32 1, %s21
    $region7: #{tpu_custom_call.1} parent=1 // loop_footer_branch
      %20 = sbr.rel target = $region3
    $region8: #{tpu_custom_call.1} parent=1 // loop_exit
      _
    %616 = vsyncpa [#allocation3], 1
    %s617 = scalar_lea.sflag [#allocation3], 1
    %618 = vsyncpa %s617, 1
    %619 = vsyncpa [#allocation6], 1
    %620 = vsyncpa [#allocation4], 1
    %s621 = scalar_lea.sflag [#allocation4], 1
    %622 = vsyncpa %s621, 1
    %623 = vsyncpa [#allocation9], 1
    %s624 = scalar_lea.sflag [#allocation9], 1
    %625 = vsyncpa %s624, 1

</llo_original>
